<compile_context>
chip_gen: v6e
topology: v6e:2x2x1
jax: 0.10.0
libtpu: 0.0.40
codegen_flags: <defaults>
</compile_context>

<pallas_src>
import functools

import jax
import jax.numpy as jnp
from jax import lax
from jax.experimental import pallas as pl
from jax.experimental.pallas import tpu as pltpu

_EPS = 1e-12  # torch.nn.functional.normalize clamp_min eps


def _round_up(x, m):
    return ((x + m - 1) // m) * m


def _vmem_capacity_bytes():
    try:
        info = pltpu.get_tpu_info()
        cap = getattr(info, "vmem_capacity_bytes", None)
        if cap:
            return int(cap)
    except Exception:
        pass
    return 64 << 20  # conservative default (v7x: 64 MiB per TensorCore)


# --------------------------------------------------------------------------
# Fused prepass: one pass over the embeddings that emits
#   (a) the (optionally dtype-cast) embedding tile, and
#   (b) the per-row sum of squares (f32), used for inv-norms / ||x||^2 / stats.
# --------------------------------------------------------------------------
def _prep_cast_kernel(x_ref, xo_ref, ss_ref):
    x = x_ref[...].astype(jnp.float32)
    ss_ref[...] = jnp.sum(x * x, axis=1, keepdims=True)
    xo_ref[...] = x.astype(xo_ref.dtype)


def _prep_sumsq_kernel(x_ref, ss_ref):
    x = x_ref[...].astype(jnp.float32)
    ss_ref[...] = jnp.sum(x * x, axis=1, keepdims=True)


def _prepare(x_padded, compute_dtype, vmem_cap):
    """Returns (x_compute, row_sumsq) for a row-padded (n_pad, d) array."""
    n_pad, d = x_padded.shape
    in_isz = jnp.dtype(x_padded.dtype).itemsize
    needs_cast = x_padded.dtype != compute_dtype
    out_isz = jnp.dtype(compute_dtype).itemsize if needs_cast else 0
    per_row = d * (in_isz + out_isz) + 4

    budget = max(4 << 20, min((vmem_cap * 3) // 4 - (6 << 20), 32 << 20))
    tb = 16
    for cand in (4096, 2048, 1024, 512, 256, 128, 64, 32, 16):
        if n_pad % cand == 0 and 2 * cand * per_row <= budget:
            tb = cand
            break
    vmem_limit = int(min((vmem_cap * 3) // 4, 2 * tb * per_row + (4 << 20)))
    params = pltpu.CompilerParams(dimension_semantics=("parallel",),
                                  vmem_limit_bytes=vmem_limit)

    if needs_cast:
        x_c, ss = pl.pallas_call(
            _prep_cast_kernel,
            out_shape=(jax.ShapeDtypeStruct((n_pad, d), compute_dtype),
                       jax.ShapeDtypeStruct((n_pad, 1), jnp.float32)),
            grid=(n_pad // tb,),
            in_specs=[pl.BlockSpec((tb, d), lambda i: (i, 0))],
            out_specs=(pl.BlockSpec((tb, d), lambda i: (i, 0)),
                       pl.BlockSpec((tb, 1), lambda i: (i, 0))),
            compiler_params=params,
        )(x_padded)
        return x_c, ss

    ss = pl.pallas_call(
        _prep_sumsq_kernel,
        out_shape=jax.ShapeDtypeStruct((n_pad, 1), jnp.float32),
        grid=(n_pad // tb,),
        in_specs=[pl.BlockSpec((tb, d), lambda i: (i, 0))],
        out_specs=pl.BlockSpec((tb, 1), lambda i: (i, 0)),
        compiler_params=params,
    )(x_padded)
    return x_padded, ss


# --------------------------------------------------------------------------
# Power epilogue specialization (clamp-then-power; avoid pow's exp+log).
# --------------------------------------------------------------------------
def _apply_power(d2, power):
    p = float(power)
    if p == 1.0:
        return jnp.sqrt(d2)
    if p == 2.0:
        return d2
    if p == int(p) and p >= 0.0:               # integer powers
        k = int(p)
        if k == 0:
            return jnp.ones_like(d2)
        out = d2 ** (k // 2) if k // 2 > 0 else None
        if k % 2 == 1:
            root = jnp.sqrt(d2)
            out = root if out is None else out * root
        return out
    if p > 0.0 and 2.0 * p == int(2.0 * p):     # half-integer powers
        k = int(p - 0.5)
        d_half = jnp.sqrt(jnp.sqrt(d2))          # d^0.5
        out = d2 ** (k // 2) if k // 2 > 0 else None
        if k % 2 == 1:
            root = jnp.sqrt(d2)
            out = root if out is None else out * root
        return d_half if out is None else out * d_half
    # TODO(synk): general non-(half-)integer powers still lower to pow (EUP exp+log).
    return jnp.sqrt(d2) ** power


# --------------------------------------------------------------------------
# Tiled pairwise-distance kernel.
#   qv_ref: (tm, 1) f32 = inv-norm of q rows (normalized) or ||q||^2 (raw)
#   rv_ref: (1, tn) f32 = inv-norm of r rows (normalized) or ||r||^2 (raw)
# --------------------------------------------------------------------------
def _dist_kernel(q_ref, r_ref, qv_ref, rv_ref, o_ref, *, normalized, power):
    s = lax.dot_general(
        q_ref[...], r_ref[...],
        dimension_numbers=(((1,), (1,)), ((), ())),   # contract D on both, no .T
        preferred_element_type=jnp.float32,
    )
    qv = qv_ref[...]
    rv = rv_ref[...]
    if normalized:
        # normalize(q).normalize(r) = (q.r) * inv_q * inv_r  ->  d2 = 2 - 2 s
        d2 = jnp.maximum(2.0 - 2.0 * (s * qv * rv), 0.0)
    else:
        d2 = jnp.maximum((qv + rv) - 2.0 * s, 0.0)
    o_ref[...] = _apply_power(d2, power).astype(o_ref.dtype)


def _plan(qn, rn, d, in_isz, out_isz, same, vmem_cap):
    lim_cap = (vmem_cap * 3) // 4           # never request 100% of physical VMEM
    tile_budget = lim_cap - (6 << 20)       # headroom for compiler scratch / sems

    tm = min(512, _round_up(qn, 128))       # MXU / lane aligned tiles
    tn = tm if same else min(512, _round_up(rn, 128))

    def need(tm_, tn_):
        return 2 * (tm_ * d * in_isz + tn_ * d * in_isz
                    + (tm_ + tn_) * 4 + tm_ * tn_ * out_isz)

    while need(tm, tn) > tile_budget and max(tm, tn) > 128:
        if same:
            tm = max(128, tm // 2)
            tn = tm
        elif tm >= tn:
            tm = max(128, tm // 2)
        else:
            tn = max(128, tn // 2)
    # TODO(synk): if even (128,128) tiles exceed the budget (very large D, v7x),
    # add a third grid axis over D with an f32 VMEM accumulator instead.

    q_pad = _round_up(qn, tm)
    r_pad = q_pad if same else _round_up(rn, tn)
    # Make the operand with FEWER blocks resident (outer grid axis) so the
    # other one is re-streamed fewer times.
    swap = (not same) and (r_pad // tn) < (q_pad // tm)
    vmem_limit = int(min(lim_cap, need(tm, tn) + (6 << 20)))
    return tm, tn, q_pad, r_pad, swap, vmem_limit


def _pairwise_l2(q_c, r_c, qv_col, rv_row, *, qn, rn, tm, tn, swap,
                 normalized, power, out_dtype, vmem_limit):
    q_pad, d = q_c.shape
    r_pad, _ = r_c.shape
    kernel = functools.partial(_dist_kernel, normalized=normalized, power=power)

    if not swap:                              # q resident, r streams
        grid = (q_pad // tm, r_pad // tn)
        q_map = lambda i, j: (i, 0)
        r_map = lambda i, j: (j, 0)
        qv_map = lambda i, j: (i, 0)
        rv_map = lambda i, j: (0, j)
        o_map = lambda i, j: (i, j)
    else:                                     # r resident, q streams
        grid = (r_pad // tn, q_pad // tm)
        q_map = lambda a, b: (b, 0)
        r_map = lambda a, b: (a, 0)
        qv_map = lambda a, b: (b, 0)
        rv_map = lambda a, b: (0, a)
        o_map = lambda a, b: (b, a)

    out = pl.pallas_call(
        kernel,
        out_shape=jax.ShapeDtypeStruct((q_pad, r_pad), out_dtype),
        grid=grid,
        in_specs=[
            pl.BlockSpec((tm, d), q_map),
            pl.BlockSpec((tn, d), r_map),
            pl.BlockSpec((tm, 1), qv_map),
            pl.BlockSpec((1, tn), rv_map),
        ],
        out_specs=pl.BlockSpec((tm, tn), o_map),
        compiler_params=pltpu.CompilerParams(
            dimension_semantics=("parallel", "parallel"),
            vmem_limit_bytes=vmem_limit),
    )(q_c, r_c, qv_col, rv_row)
    return out[:qn, :rn]


class BaseDistancePallas:
    """JAX/Pallas counterpart of BaseDistance (LpDistance p=2 compute_mat)."""

    # TODO(synk): BaseDistance.compute_mat is abstract in PyTorch; this uses the
    # standard LpDistance (p=2) concrete implementation.

    def __init__(self, normalize_embeddings=True, p=2, power=1,
                 is_inverted=False, collect_stats=True,
                 use_bf16_matmul=True, out_dtype=jnp.float32):
        assert p == 2, "only p=2 (L2) is implemented in the kernel"
        self.normalize_embeddings = normalize_embeddings
        self.p = p
        self.power = power
        self.is_inverted = is_inverted
        self.collect_stats = collect_stats
        self.use_bf16_matmul = use_bf16_matmul
        self.out_dtype = out_dtype
        self.stats = {}

    # -------- BaseDistance helper parity (not used in forward) --------
    def smallest_dist(self, *args, **kwargs):
        return jnp.max(*args, **kwargs) if self.is_inverted else jnp.min(*args, **kwargs)

    def largest_dist(self, *args, **kwargs):
        return jnp.min(*args, **kwargs) if self.is_inverted else jnp.max(*args, **kwargs)

    def margin(self, x, y):
        return y - x if self.is_inverted else x - y

    def reset_stats(self):
        self.stats = {}

    # ------------------------------ forward ---------------------------
    def __call__(self, query_emb, ref_emb=None):
        self.reset_stats()
        q = jnp.asarray(query_emb)
        same = ref_emb is None
        r = q if same else jnp.asarray(ref_emb)
        qn, d = q.shape
        rn, rd = r.shape
        assert rd == d

        compute_dtype = jnp.bfloat16 if self.use_bf16_matmul else jnp.float32
        in_isz = jnp.dtype(compute_dtype).itemsize
        out_isz = jnp.dtype(self.out_dtype).itemsize
        vmem_cap = _vmem_capacity_bytes()

        tm, tn, q_pad, r_pad, swap, vmem_limit = _plan(
            qn, rn, d, in_isz, out_isz, same, vmem_cap)

        # Fused prepass: cast (if needed) + per-row sum of squares, one HBM pass.
        q_p = q if q_pad == qn else jnp.pad(q, ((0, q_pad - qn), (0, 0)))
        q_c, q_ss = _prepare(q_p, compute_dtype, vmem_cap)
        if same:
            r_c, r_ss = q_c, q_ss
        else:
            r_p = r if r_pad == rn else jnp.pad(r, ((0, r_pad - rn), (0, 0)))
            r_c, r_ss = _prepare(r_p, compute_dtype, vmem_cap)

        if self.normalize_embeddings:
            # 1 / max(||x||, eps) == rsqrt(max(sumsq, eps^2)); N-element vectors.
            qv = lax.rsqrt(jnp.maximum(q_ss, _EPS * _EPS))
            rv = qv if same else lax.rsqrt(jnp.maximum(r_ss, _EPS * _EPS))
        else:
            qv = q_ss
            rv = r_ss
        rv_row = rv.reshape(1, -1)   # (1, r_pad): lane-major, no per-tile relayout

        if self.collect_stats:
            q_norm = jnp.sqrt(q_ss[:qn, 0])
            r_norm = q_norm if same else jnp.sqrt(r_ss[:rn, 0])
            if self.normalize_embeddings:
                fq = jnp.mean(q_norm * qv[:qn, 0])
                fr = fq if same else jnp.mean(r_norm * rv[:rn, 0])
            else:
                fq = jnp.mean(q_norm)
                fr = fq if same else jnp.mean(r_norm)
            self.stats = {
                "initial_avg_query_norm": jnp.mean(q_norm),
                "initial_avg_ref_norm": jnp.mean(r_norm),
                "final_avg_query_norm": fq,
                "final_avg_ref_norm": fr,
            }

        # TODO(synk): for ref_emb=None the lower triangle could be skipped and
        # mirrored (symmetric matrix); not implemented.
        mat = _pairwise_l2(q_c, r_c, qv, rv_row, qn=qn, rn=rn, tm=tm, tn=tn,
                           swap=swap, normalized=self.normalize_embeddings,
                           power=self.power, out_dtype=self.out_dtype,
                           vmem_limit=vmem_limit)
        assert mat.shape == (qn, rn)
        return mat


if __name__ == "__main__":
    key = jax.random.PRNGKey(0)
    kq, kr = jax.random.split(key)

    Q, R, D = 8, 8, 32  # small shapes: 8 query embeddings, 8 refs, hidden=32
    query = jax.random.normal(kq, (Q, D), dtype=jnp.float32)
    ref = jax.random.normal(kr, (R, D), dtype=jnp.float32)

    def ref_forward(q, r, normalize=True, power=1):
        if normalize:
            q = q / jnp.maximum(jnp.linalg.norm(q, axis=1, keepdims=True), _EPS)
            r = r / jnp.maximum(jnp.linalg.norm(r, axis=1, keepdims=True), _EPS)
        d2 = jnp.sum((q[:, None, :] - r[None, :, :]) ** 2, axis=-1)
        m = jnp.sqrt(jnp.maximum(d2, 0.0))
        if power != 1:
            m = m ** power
        return m

    # ---- 1. f32 path, normalized, power=1 (tight check + self-distance) ----
    dist_f32 = BaseDistancePallas(normalize_embeddings=True, power=1,
                                  use_bf16_matmul=False)
    m1 = dist_f32(query, ref)
    jax.block_until_ready(m1)
    exp1 = ref_forward(query, ref)
    assert jnp.allclose(m1, exp1, atol=1e-4, rtol=1e-4), "mismatch (f32 normalized)"

    m_self = dist_f32(query)            # ref_emb=None, same semantics as PyTorch
    jax.block_until_ready(m_self)
    assert jnp.allclose(jnp.diag(m_self), 0.0, atol=5e-3), "self-dist diag != 0"
    assert jnp.allclose(m_self, ref_forward(query, query), atol=5e-3), "self mismatch"

    # ---- 2. default (bf16 MXU) path, normalized, power=1 (loose check) ----
    dist_bf16 = BaseDistancePallas()    # use_bf16_matmul=True by default
    m2 = dist_bf16(query, ref)
    jax.block_until_ready(m2)
    assert jnp.allclose(m2, exp1, atol=3e-2, rtol=3e-2), "mismatch (bf16 normalized)"

    # ---- 3. un-normalized path, power=2, f32 (q_sq/r_sq branch) ----
    dist_p2 = BaseDistancePallas(normalize_embeddings=False, power=2,
                                 use_bf16_matmul=False)
    m3 = dist_p2(query, ref)
    jax.block_until_ready(m3)
    exp3 = ref_forward(query, ref, normalize=False, power=2)
    assert jnp.allclose(m3, exp3, atol=1e-3, rtol=1e-4), "mismatch (raw, p^2)"

    # ---- 4. odd-integer power epilogue (power=3), f32 normalized ----
    dist_p3 = BaseDistancePallas(normalize_embeddings=True, power=3,
                                 use_bf16_matmul=False)
    m4 = dist_p3(query, ref)
    jax.block_until_ready(m4)
    exp4 = ref_forward(query, ref, normalize=True, power=3)
    assert jnp.allclose(m4, exp4, atol=1e-3, rtol=1e-4), "mismatch (power=3)"

    print("KERNEL_OK")
</pallas_src>

<mosaic_0001>
module attributes {stable_mosaic.version = 11 : i64} {
  func.func @_prep_sumsq_kernel(%arg0: i32, %arg1: memref<128x32xf32, #tpu.memory_space<vmem>>, %arg2: memref<128x1xf32, #tpu.memory_space<vmem>>) attributes {dimension_semantics = [#tpu.dimension_semantics<parallel>], iteration_bounds = array<i64: 1>, scalar_prefetch = 0 : i64, scratch_operands = 0 : i64, tpu.core_type = #tpu.core_type<tc>, window_params = [{transform_indices = @transform_0, window_bounds = array<i64: 128, 32>}, {transform_indices = @transform_1, window_bounds = array<i64: 128, 1>}]} {
    %c0 = arith.constant 0 : index
    %c0_0 = arith.constant 0 : index
    %0 = vector.load %arg1[%c0, %c0_0] : memref<128x32xf32, #tpu.memory_space<vmem>>, vector<128x32xf32>
    %1 = arith.mulf %0, %0 : vector<128x32xf32>
    %cst = arith.constant dense<0.000000e+00> : vector<128xf32>
    %2 = vector.multi_reduction <add>, %1, %cst [1] : vector<128x32xf32> to vector<128xf32>
    %3 = vector.shape_cast %2 : vector<128xf32> to vector<128x1xf32>
    %c0_1 = arith.constant 0 : index
    %c0_2 = arith.constant 0 : index
    %4 = vector.load %arg2[%c0_1, %c0_2] : memref<128x1xf32, #tpu.memory_space<vmem>>, vector<128x1xf32>
    tpu.vector_store %arg2[%c0_1, %c0_2], %3 {strides = array<i32>} : memref<128x1xf32, #tpu.memory_space<vmem>>, vector<128x1xf32>,
    return
  }
  func.func @transform_0(%arg0: i32) -> (i32, i32) {
    %c0_i32 = arith.constant 0 : i32
    %c0_i32_0 = arith.constant 0 : i32
    return %arg0, %c0_i32 : i32, i32
  }
  func.func @transform_1(%arg0: i32) -> (i32, i32) {
    %c0_i32 = arith.constant 0 : i32
    %c0_i32_0 = arith.constant 0 : i32
    return %arg0, %c0_i32 : i32, i32
  }
}

</mosaic_0001>

<llo_original>
// kernel: tpu_custom_call.1
$region0: #{tpu_custom_call.1}
  #allocation0 [shape = 'u32[]', space=smem, size = 0x4, offset = 0x4, fixed_abs, tag = 'smem constant byte address 0x4 - core index']
  #allocation1 [shape = 'u32[144,128]{1,0:T(1,128)}', space=vmem, size = 0x12000, scoped, tag = 'internal scratch']
  %s0 = inlined_call_operand.vmem [shape: f32[128,32], index: 0, kind: input, shape index: {}]
  %s1 = inlined_call_operand.vmem [shape: f32[128,1], index: 1, kind: output, shape index: {}]
  %s2 = sld [smem:[#allocation0]]
  $region14: #{tpu_custom_call.1} parent=0
    _
  %s4 = ssub.s32 1, %s2
  %s5 = scalar_select 0, %s4, %s2
  // Predicated region
  $region2: #{tpu_custom_call.1} parent=0 // pred_check
    _
  $region3: #{tpu_custom_call.1} parent=0 // pred_check_branch
    %7 = sbr.rel (0) target = $region5
  $region4: #{tpu_custom_call.1} parent=0 // pred_region
    _
  $region5: #{tpu_custom_call.1} parent=0 // pred_fallthru
    _
  %v8 = vld [vmem:[%s0] sm:$0xff]
  %v9 = vld [vmem:[%s0 + $0x8] sm:$0xff]
  %v10 = vld [vmem:[%s0 + $0x10] sm:$0xff]
  %v11 = vld [vmem:[%s0 + $0x18] sm:$0xff]
  %v12 = vld [vmem:[%s0 + $0x20] sm:$0xff]
  %v13 = vld [vmem:[%s0 + $0x28] sm:$0xff]
  %v14 = vld [vmem:[%s0 + $0x30] sm:$0xff]
  %v15 = vld [vmem:[%s0 + $0x38] sm:$0xff]
  %v16 = vld [vmem:[%s0 + $0x40] sm:$0xff]
  %v17 = vld [vmem:[%s0 + $0x48] sm:$0xff]
  %v18 = vld [vmem:[%s0 + $0x50] sm:$0xff]
  %v19 = vld [vmem:[%s0 + $0x58] sm:$0xff]
  %v20 = vld [vmem:[%s0 + $0x60] sm:$0xff]
  %v21 = vld [vmem:[%s0 + $0x68] sm:$0xff]
  %v22 = vld [vmem:[%s0 + $0x70] sm:$0xff]
  %v23 = vld [vmem:[%s0 + $0x78] sm:$0xff]
  %v24 = vmul.f32 %v8, %v8
  %v25 = vmul.f32 %v9, %v9
  %v26 = vmul.f32 %v10, %v10
  %v27 = vmul.f32 %v11, %v11
  %v28 = vmul.f32 %v12, %v12
  %v29 = vmul.f32 %v13, %v13
  %v30 = vmul.f32 %v14, %v14
  %v31 = vmul.f32 %v15, %v15
  %v32 = vmul.f32 %v16, %v16
  %v33 = vmul.f32 %v17, %v17
  %v34 = vmul.f32 %v18, %v18
  %v35 = vmul.f32 %v19, %v19
  %v36 = vmul.f32 %v20, %v20
  %v37 = vmul.f32 %v21, %v21
  %v38 = vmul.f32 %v22, %v22
  %v39 = vmul.f32 %v23, %v23
  %vm40 = vcmask 261120
  %v41 = vsel %vm40, %v24, 0.0
  %42 = vadd.xlane.f32.xlu0 %v41
  %v43 = vpop.xlane.xlu0 %42
  %v44 = vsel %vm40, %v25, 0.0
  %45 = vadd.xlane.f32.xlu0 %v44
  %v46 = vpop.xlane.xlu0 %45
  %v47 = vsel %vm40, %v26, 0.0
  %48 = vadd.xlane.f32.xlu0 %v47
  %v49 = vpop.xlane.xlu0 %48
  %v50 = vsel %vm40, %v27, 0.0
  %51 = vadd.xlane.f32.xlu0 %v50
  %v52 = vpop.xlane.xlu0 %51
  %v53 = vsel %vm40, %v28, 0.0
  %54 = vadd.xlane.f32.xlu0 %v53
  %v55 = vpop.xlane.xlu0 %54
  %v56 = vsel %vm40, %v29, 0.0
  %57 = vadd.xlane.f32.xlu0 %v56
  %v58 = vpop.xlane.xlu0 %57
  %v59 = vsel %vm40, %v30, 0.0
  %60 = vadd.xlane.f32.xlu0 %v59
  %v61 = vpop.xlane.xlu0 %60
  %v62 = vsel %vm40, %v31, 0.0
  %63 = vadd.xlane.f32.xlu0 %v62
  %v64 = vpop.xlane.xlu0 %63
  %v65 = vsel %vm40, %v32, 0.0
  %66 = vadd.xlane.f32.xlu0 %v65
  %v67 = vpop.xlane.xlu0 %66
  %v68 = vsel %vm40, %v33, 0.0
  %69 = vadd.xlane.f32.xlu0 %v68
  %v70 = vpop.xlane.xlu0 %69
  %v71 = vsel %vm40, %v34, 0.0
  %72 = vadd.xlane.f32.xlu0 %v71
  %v73 = vpop.xlane.xlu0 %72
  %v74 = vsel %vm40, %v35, 0.0
  %75 = vadd.xlane.f32.xlu0 %v74
  %v76 = vpop.xlane.xlu0 %75
  %v77 = vsel %vm40, %v36, 0.0
  %78 = vadd.xlane.f32.xlu0 %v77
  %v79 = vpop.xlane.xlu0 %78
  %v80 = vsel %vm40, %v37, 0.0
  %81 = vadd.xlane.f32.xlu0 %v80
  %v82 = vpop.xlane.xlu0 %81
  %v83 = vsel %vm40, %v38, 0.0
  %84 = vadd.xlane.f32.xlu0 %v83
  %v85 = vpop.xlane.xlu0 %84
  %v86 = vsel %vm40, %v39, 0.0
  %87 = vadd.xlane.f32.xlu0 %v86
  %v88 = vpop.xlane.xlu0 %87
  %vm89 = vcmask 7168
  %90 = vst.msk [vmem:[%s1] sm:$0xff] %vm89, %v43
  %91 = vst.msk [vmem:[%s1 + $0x8] sm:$0xff] %vm89, %v46
  %92 = vst.msk [vmem:[%s1 + $0x10] sm:$0xff] %vm89, %v49
  %93 = vst.msk [vmem:[%s1 + $0x18] sm:$0xff] %vm89, %v52
  %94 = vst.msk [vmem:[%s1 + $0x20] sm:$0xff] %vm89, %v55
  %95 = vst.msk [vmem:[%s1 + $0x28] sm:$0xff] %vm89, %v58
  %96 = vst.msk [vmem:[%s1 + $0x30] sm:$0xff] %vm89, %v61
  %97 = vst.msk [vmem:[%s1 + $0x38] sm:$0xff] %vm89, %v64
  %98 = vst.msk [vmem:[%s1 + $0x40] sm:$0xff] %vm89, %v67
  %99 = vst.msk [vmem:[%s1 + $0x48] sm:$0xff] %vm89, %v70
  %100 = vst.msk [vmem:[%s1 + $0x50] sm:$0xff] %vm89, %v73
  %101 = vst.msk [vmem:[%s1 + $0x58] sm:$0xff] %vm89, %v76
  %102 = vst.msk [vmem:[%s1 + $0x60] sm:$0xff] %vm89, %v79
  %103 = vst.msk [vmem:[%s1 + $0x68] sm:$0xff] %vm89, %v82
  %104 = vst.msk [vmem:[%s1 + $0x70] sm:$0xff] %vm89, %v85
  %105 = vst.msk [vmem:[%s1 + $0x78] sm:$0xff] %vm89, %v88
  // Predicated region
  $region6: #{tpu_custom_call.1} parent=0 // pred_check
    _
  $region7: #{tpu_custom_call.1} parent=0 // pred_check_branch
    %107 = sbr.rel (0) target = $region9
  $region8: #{tpu_custom_call.1} parent=0 // pred_region
    _
  $region9: #{tpu_custom_call.1} parent=0 // pred_fallthru
    _
  // Predicated region
  $region10: #{tpu_custom_call.1} parent=0 // pred_check
    _
  $region11: #{tpu_custom_call.1} parent=0 // pred_check_branch
    %109 = sbr.rel (0) target = $region13
  $region12: #{tpu_custom_call.1} parent=0 // pred_region
    _
  $region13: #{tpu_custom_call.1} parent=0 // pred_fallthru
    _

</llo_original>
